<compile_context>
chip_gen: v6e
topology: v6e:2x2x1
jax: 0.10.0
libtpu: 0.0.40
codegen_flags: <defaults>
</compile_context>

<pallas_src>
import functools
import math

import jax
import jax.numpy as jnp
from jax.experimental import pallas as pl
from jax.experimental.pallas import tpu as pltpu

BN_EPS = 1e-5


@functools.lru_cache(maxsize=None)
def _vmem_limit():
    """Scoped-VMEM cap derived from the actual chip (v7x only has 64 MiB of VMEM)."""
    try:
        cap = pltpu.get_tpu_info().vmem_capacity_bytes
    except Exception:
        cap = 128 * 1024 * 1024
    return int(max(16 * 1024 * 1024, min(cap // 2, 64 * 1024 * 1024)))


def _pick_tile_m(m):
    """Largest row tile that still gives >=2 grid steps (keeps both v7x TCs busy)."""
    for t in (512, 256, 128, 64, 32, 16, 8):
        if m % t == 0 and m // t >= 2:
            return t
    return m


# --------------------------------------------------------------------------- #
# Kernel 1: proj_1x1 = grouped 1x1 conv (folded, lane-dense) + BN + PReLU      #
# --------------------------------------------------------------------------- #

def _proj_matmul_kernel(x_ref, w_ref, ab_ref, o_ref):
    # f32 MXU (channel count is tiny; bf16 cast would be pure VPU overhead, esp. on v5e).
    y = jnp.dot(x_ref[...], w_ref[...], preferred_element_type=jnp.float32)
    y = y + ab_ref[0:1, :]                                   # folded BN bias (scale is in w)
    o_ref[...] = jnp.where(y >= 0.0, y, ab_ref[1:2, :] * y).astype(o_ref.dtype)


@jax.jit
def proj_matmul(x, w, ab):
    """o = prelu((x @ w) + bias); x:(M, K) folded pixels, w has BN scale folded in."""
    M, K = x.shape
    N = w.shape[1]
    tm = _pick_tile_m(M)
    return pl.pallas_call(
        _proj_matmul_kernel,
        grid=(M // tm,),
        in_specs=[
            pl.BlockSpec((tm, K), lambda i: (i, 0)),
            pl.BlockSpec((K, N), lambda i: (0, 0)),          # weights stay VMEM-resident
            pl.BlockSpec((2, N), lambda i: (0, 0)),           # packed [bias; alpha]
        ],
        out_specs=pl.BlockSpec((tm, N), lambda i: (i, 0)),
        out_shape=jax.ShapeDtypeStruct((M, N), jnp.float32),
        compiler_params=pltpu.CompilerParams(
            dimension_semantics=("parallel",),
            vmem_limit_bytes=_vmem_limit(),
        ),
    )(x, w, ab)


# --------------------------------------------------------------------------- #
# Kernel 2: fused "tail": dilated depthwise branches + HFF prefix sums +       #
#           spectral conv2 + spectral HFF add + BR + grouped conv_1x1_exp(+BN) #
#           + residual + module PReLU.  One lane-dense store per image.        #
# --------------------------------------------------------------------------- #

def _fused_tail_kernel(out1_ref, sfu_ref, xres_ref, dww_ref, br_ref, w2f_ref,
                       mexp_ref, eb_ref, o_ref, xp_ref, *,
                       K, d_rates, H, Wn, n, pad, k, WnOut):
    c = (K - 1) // 2
    # Zero-padded halo scratch, refreshed every step (no cross-step state -> safe when the
    # "parallel" batch axis is sharded across v7x's two TensorCores).  Avoids the previous
    # HBM-materialized jnp.pad copy of out1.
    xp_ref[...] = jnp.zeros_like(xp_ref)
    xp_ref[pad:pad + H, pad * n:pad * n + Wn] = out1_ref[0]
    x = xp_ref[...]                                           # (Hp, Wp*n)

    prev = None
    out_acc = jnp.zeros((H, WnOut), jnp.float32)
    for bidx, d in enumerate(d_rates):
        acc = jnp.zeros((H, Wn), jnp.float32)
        for j in range(K):                                    # lane shift hoisted: 3 per branch
            c0 = (pad + (j - c) * d) * n
            xc = x[:, c0:c0 + Wn]                             # (Hp, Wn) column-shifted view
            for i in range(K):
                r0 = pad + (i - c) * d
                acc = acc + xc[r0:r0 + H, :] * dww_ref[bidx, i * K + j, :]
        y = acc if prev is None else acc + prev               # HFF cumulative merge
        prev = y
        z = y * br_ref[0, bidx, :] + br_ref[1, bidx, :]        # BR: folded BN
        z = jnp.where(z >= 0.0, z, br_ref[2, bidx, :] * z)     # BR: PReLU
        # grouped conv_1x1_exp (group = branch), BN scale folded in, scattered straight
        # into the folded (w, ch) output lanes via a kron'd placement matrix (MXU).
        out_acc = out_acc + jnp.dot(z, mexp_ref[bidx], preferred_element_type=jnp.float32)

    # Last branch: SpectralTransform conv2 (1x1) of (x1 + fu), fused here as a
    # block-diagonal folded matmul, then the HFF add, BR and its exp group.
    spec = jnp.dot(sfu_ref[0], w2f_ref[...], preferred_element_type=jnp.float32)
    y = spec + prev
    z = y * br_ref[0, k - 1, :] + br_ref[1, k - 1, :]
    z = jnp.where(z >= 0.0, z, br_ref[2, k - 1, :] * z)
    out_acc = out_acc + jnp.dot(z, mexp_ref[k - 1], preferred_element_type=jnp.float32)

    # conv_1x1_exp folded-BN bias + `expanded + input` residual + module PReLU.
    o = out_acc + eb_ref[0:1, :] + xres_ref[0]
    o_ref[0] = jnp.where(o >= 0.0, o, eb_ref[1:2, :] * o).astype(o_ref.dtype)


@functools.partial(jax.jit, static_argnames=("d_rates", "W"))
def fused_eesp_tail(out1, sfu, xres, dw_w_t, br_pack, w2_fold, m_exp, eb_pack,
                    *, d_rates, W):
    """out1:(B,H,W*n) sfu:(B,H,W*half) xres:(B,H,W*nIn) -> (B,H,W*nOut) final output."""
    B, H, Wn = out1.shape
    n = Wn // W
    Whalf = sfu.shape[2]
    WnIn = xres.shape[2]
    k, _, WnOut = m_exp.shape
    nb = len(d_rates)
    K = 3
    pad = ((K - 1) // 2) * max(d_rates)
    Hp = H + 2 * pad
    Wpn = (W + 2 * pad) * n
    # TODO(synk): for larger H/W add an H-tile grid axis with a 2*max(d) halo instead of the
    # batch-only grid (keeps per-step VMEM bounded under v7x's 64 MiB).

    kern = functools.partial(_fused_tail_kernel, K=K, d_rates=tuple(d_rates),
                             H=H, Wn=Wn, n=n, pad=pad, k=k, WnOut=WnOut)
    return pl.pallas_call(
        kern,
        grid=(B,),
        in_specs=[
            pl.BlockSpec((1, H, Wn), lambda b: (b, 0, 0)),
            pl.BlockSpec((1, H, Whalf), lambda b: (b, 0, 0)),
            pl.BlockSpec((1, H, WnIn), lambda b: (b, 0, 0)),
            pl.BlockSpec((nb, K * K, Wn), lambda b: (0, 0, 0)),
            pl.BlockSpec((3, k, Wn), lambda b: (0, 0, 0)),
            pl.BlockSpec((Whalf, Wn), lambda b: (0, 0)),
            pl.BlockSpec((k, Wn, WnOut), lambda b: (0, 0, 0)),
            pl.BlockSpec((2, WnOut), lambda b: (0, 0)),
        ],
        out_specs=pl.BlockSpec((1, H, WnOut), lambda b: (b, 0, 0)),
        out_shape=jax.ShapeDtypeStruct((B, H, WnOut), jnp.float32),
        scratch_shapes=[pltpu.VMEM((Hp, Wpn), jnp.float32)],
        compiler_params=pltpu.CompilerParams(
            dimension_semantics=("parallel",),
            vmem_limit_bytes=_vmem_limit(),
        ),
    )(out1, sfu, xres, dw_w_t, br_pack, w2_fold, m_exp, eb_pack)


# --------------------------------------------------------------------------- #
# Parameter construction (inference-mode BN folded; all W-tiled / kron-folded  #
# tensors precomputed ONCE here, per the perf review)                          #
# --------------------------------------------------------------------------- #

class KeyGen:
    def __init__(self, key):
        self.key = key

    def __call__(self):
        self.key, k = jax.random.split(self.key)
        return k


def bn_fold(c):
    gamma = jnp.ones((c,), jnp.float32)
    beta = jnp.zeros((c,), jnp.float32)
    mean = jnp.zeros((c,), jnp.float32)
    var = jnp.ones((c,), jnp.float32)
    scale = gamma / jnp.sqrt(var + BN_EPS)
    return scale, beta - mean * scale


def block_diag_weight(kg, cin, cout, groups):
    """Grouped 1x1 conv (bias=False) expressed as a block-diagonal (cin, cout) matrix."""
    cin_g, cout_g = cin // groups, cout // groups
    std = math.sqrt(2.0 / max(cin_g * cout_g, 1))
    w = jnp.zeros((cin, cout), jnp.float32)
    for g in range(groups):
        blk = jax.random.normal(kg(), (cin_g, cout_g), jnp.float32) * std
        w = w.at[g * cin_g:(g + 1) * cin_g, g * cout_g:(g + 1) * cout_g].set(blk)
    return w


def build_eesp_v3_params(key, nIn, nOut, spatial_hw, d_rates=(1, 2, 8)):
    H, W = spatial_hw
    del H  # only the width enters the folded-lane parameter layouts
    kg = KeyGen(key)
    k = len(d_rates) + 1
    n = nOut // k
    assert n * k == nOut, "nOut must be divisible by k"
    assert nIn == nOut, "stride=1 residual path requires nIn == nOut"
    half = n // 2
    assert half * 2 == n, "SpectralTransform needs an even branch width"
    nb = len(d_rates)
    eye_w = jnp.eye(W, dtype=jnp.float32)

    # proj_1x1 = CBR(nIn, n, 1, groups=k): BN scale folded into the kron'd weights.
    w_proj = block_diag_weight(kg, nIn, n, k)
    s_p, b_p = bn_fold(n)
    proj_wfold = jnp.kron(eye_w, w_proj * s_p[None, :])                    # (W*nIn, W*n)
    proj_ab = jnp.stack([jnp.tile(b_p, W),
                         jnp.tile(jnp.full((n,), 0.25, jnp.float32), W)])  # (2, W*n)

    # CDilated depthwise 3x3 weights (no BN / act), tiled along the folded W lanes.
    dw_w = jax.random.normal(kg(), (nb, 3, 3, n), jnp.float32) * math.sqrt(2.0 / 9.0)
    dw_w_t = jnp.tile(dw_w.reshape(nb, 9, 1, n), (1, 1, W, 1)).reshape(nb, 9, W * n)

    # BR(nOut) = BN + PReLU, viewed per branch (channel block g*n..g*n+n), W-tiled.
    br_s, br_b = bn_fold(nOut)
    br_a = jnp.full((nOut,), 0.25, jnp.float32)

    def per_branch_tile(p):                                                # (nOut,) -> (k, W*n)
        return jnp.tile(p.reshape(k, 1, n), (1, W, 1)).reshape(k, W * n)

    br_pack = jnp.stack([per_branch_tile(br_s), per_branch_tile(br_b),
                         per_branch_tile(br_a)])                           # (3, k, W*n)

    # SpectralTransform(n, n, enable_lfu=False): conv1+BN, FourierUnit conv+BN, conv2.
    bn1_s, bn1_b = bn_fold(half)
    bnfu_s, bnfu_b = bn_fold(2 * half)
    spectral = dict(
        w1=jax.random.normal(kg(), (n, half), jnp.float32) * math.sqrt(2.0 / n),
        bn1_scale=bn1_s, bn1_bias=bn1_b,
        w_fu=jax.random.normal(kg(), (2 * half, 2 * half), jnp.float32)
             * math.sqrt(2.0 / (2 * half)),
        bn_fu_scale=bnfu_s, bn_fu_bias=bnfu_b,
    )
    w2 = jax.random.normal(kg(), (half, n), jnp.float32) * math.sqrt(2.0 / half)
    w2_fold = jnp.kron(eye_w, w2)                                          # (W*half, W*n)

    # conv_1x1_exp = CB(nOut, nOut, 1, groups=k): per-group "placement" matmuls that both
    # apply the group weights (BN scale folded in) and scatter the branch into the folded
    # (w, ch) output lanes of the tail kernel.
    w_exp = block_diag_weight(kg, nOut, nOut, k)
    e_s, e_b = bn_fold(nOut)
    m_exp = jnp.stack([jnp.kron(eye_w, w_exp[g * n:(g + 1) * n, :] * e_s[None, :])
                       for g in range(k)])                                 # (k, W*n, W*nOut)
    act_a = jnp.full((nOut,), 0.25, jnp.float32)                           # module_act PReLU
    eb_pack = jnp.stack([jnp.tile(e_b, W), jnp.tile(act_a, W)])            # (2, W*nOut)

    return dict(proj_wfold=proj_wfold, proj_ab=proj_ab, dw_w_t=dw_w_t, br_pack=br_pack,
                spectral=spectral, w2_fold=w2_fold, m_exp=m_exp, eb_pack=eb_pack)


# --------------------------------------------------------------------------- #
# Forward                                                                      #
# --------------------------------------------------------------------------- #

@functools.partial(jax.jit, static_argnames=("d_rates",))
def eesp_v3_forward(params, x_nchw, *, d_rates=(1, 2, 8)):
    """EESP_V3.forward (stride=1, down_method='esp').  NCHW in / NCHW out."""
    B, nIn, H, W = x_nchw.shape
    assert params["proj_wfold"].shape[0] == W * nIn, "params built for a different W/nIn"
    x_nhwc = jnp.transpose(x_nchw, (0, 2, 3, 1)).astype(jnp.float32)       # -> NHWC
    Wn = params["w2_fold"].shape[1]
    n = Wn // W
    half = params["w2_fold"].shape[0] // W
    k = params["m_exp"].shape[0]
    nOut = k * n

    xf = x_nhwc.reshape(B * H, W * nIn)                                    # folded, 256 lanes

    # REDUCE: proj_1x1 (grouped 1x1 + BN + PReLU) as a folded lane-dense Pallas matmul.
    out1_f = proj_matmul(xf, params["proj_wfold"], params["proj_ab"])      # (B*H, W*n)
    out1 = out1_f.reshape(B, H, W, n)

    # SpectralTransform head.  The GEMV-sized 1x1 convs (conv1, FourierUnit conv) stay in
    # XLA where they fuse with the FFTs; conv2 (w2) is fused into the Pallas tail kernel.
    # TODO(synk): rfft2/irfft2 have no Pallas primitive; they run through jnp.fft (XLA).
    sp = params["spectral"]
    x1 = jnp.einsum("bhwc,cd->bhwd", out1, sp["w1"]) * sp["bn1_scale"] + sp["bn1_bias"]
    x1 = jnp.maximum(x1, 0.0)
    f = jnp.fft.rfft2(x1, axes=(1, 2), norm="ortho")                       # (B, H, Wf, half)
    Wf = f.shape[2]
    st = jnp.stack([jnp.real(f), jnp.imag(f)], axis=-1).reshape(B, H, Wf, 2 * half)
    r = jnp.einsum("bhwc,cd->bhwd", st, sp["w_fu"]) * sp["bn_fu_scale"] + sp["bn_fu_bias"]
    r = jnp.maximum(r, 0.0).reshape(B, H, Wf, half, 2)
    fu = jnp.fft.irfft2(jax.lax.complex(r[..., 0], r[..., 1]), s=(H, W),
                        axes=(1, 2), norm="ortho")                         # (B, H, W, half)
    sfu = (x1 + fu).reshape(B, H, W * half)                                # conv2 input

    # SPLIT/TRANSFORM/MERGE + BR + conv_1x1_exp(+BN) + residual + module PReLU, one kernel.
    out_f = fused_eesp_tail(out1_f.reshape(B, H, Wn), sfu,
                            x_nhwc.reshape(B, H, W * nIn),
                            params["dw_w_t"], params["br_pack"], params["w2_fold"],
                            params["m_exp"], params["eb_pack"],
                            d_rates=tuple(d_rates), W=W)                   # (B, H, W*nOut)

    return jnp.transpose(out_f.reshape(B, H, W, nOut), (0, 3, 1, 2))       # -> NCHW


# --------------------------------------------------------------------------- #

if __name__ == "__main__":
    nIn = nOut = 16            # k = 4 branches -> n = 4 channels per branch
    B, H, W = 2, 16, 16
    d_rates = (1, 2, 8)

    key = jax.random.PRNGKey(0)
    k_x, k_p = jax.random.split(key)
    x = jax.random.normal(k_x, (B, nIn, H, W), jnp.float32)
    params = build_eesp_v3_params(k_p, nIn, nOut, (H, W), d_rates)

    out = eesp_v3_forward(params, x, d_rates=d_rates)
    jax.block_until_ready(out)
    assert out.shape == (B, nOut, H, W)
    print("KERNEL_OK")
</pallas_src>

<mosaic_0001>
module attributes {stable_mosaic.version = 11 : i64} {
  func.func @_proj_matmul_kernel(%arg0: i32, %arg1: memref<16x256xf32, #tpu.memory_space<vmem>>, %arg2: memref<256x64xf32, #tpu.memory_space<vmem>>, %arg3: memref<2x64xf32, #tpu.memory_space<vmem>>, %arg4: memref<16x64xf32, #tpu.memory_space<vmem>>) attributes {dimension_semantics = [#tpu.dimension_semantics<parallel>], iteration_bounds = array<i64: 2>, scalar_prefetch = 0 : i64, scratch_operands = 0 : i64, tpu.core_type = #tpu.core_type<tc>, window_params = [{transform_indices = @transform_0, window_bounds = array<i64: 16, 256>}, {pipeline_mode = #tpu.pipeline_mode<synchronous>, transform_indices = @transform_1, window_bounds = array<i64: 256, 64>}, {pipeline_mode = #tpu.pipeline_mode<synchronous>, transform_indices = @transform_2, window_bounds = array<i64: 2, 64>}, {transform_indices = @transform_3, window_bounds = array<i64: 16, 64>}]} {
    %c0 = arith.constant 0 : index
    %c0_0 = arith.constant 0 : index
    %0 = vector.load %arg1[%c0, %c0_0] : memref<16x256xf32, #tpu.memory_space<vmem>>, vector<16x256xf32>
    %c0_1 = arith.constant 0 : index
    %c0_2 = arith.constant 0 : index
    %1 = vector.load %arg2[%c0_1, %c0_2] : memref<256x64xf32, #tpu.memory_space<vmem>>, vector<256x64xf32>
    %cst = arith.constant dense<0.000000e+00> : vector<16x64xf32>
    %2 = tpu.matmul %0, %1, %cst {dimension_numbers = #tpu.dot_dimension_numbers<[1], [0], [0], [1], [0, 0, 1, 1], [], []>} : vector<16x256xf32>, vector<256x64xf32>, vector<16x64xf32> -> vector<16x64xf32>
    %c0_3 = arith.constant 0 : index
    %c0_4 = arith.constant 0 : index
    %3 = vector.load %arg3[%c0_3, %c0_4] : memref<2x64xf32, #tpu.memory_space<vmem>>, vector<1x64xf32>
    %4 = vector.broadcast %3 : vector<1x64xf32> to vector<16x64xf32>
    %5 = arith.addf %2, %4 : vector<16x64xf32>
    %cst_5 = arith.constant 0.000000e+00 : f32
    %6 = vector.broadcast %cst_5 : f32 to vector<16x64xf32>
    %7 = arith.cmpf oge, %5, %6 : vector<16x64xf32>
    %c1 = arith.constant 1 : index
    %c0_6 = arith.constant 0 : index
    %8 = vector.load %arg3[%c1, %c0_6] : memref<2x64xf32, #tpu.memory_space<vmem>>, vector<1x64xf32>
    %9 = vector.broadcast %8 : vector<1x64xf32> to vector<16x64xf32>
    %10 = arith.mulf %9, %5 : vector<16x64xf32>
    %11 = arith.select %7, %5, %10 : vector<16x64xi1>, vector<16x64xf32>
    %c0_7 = arith.constant 0 : index
    %c0_8 = arith.constant 0 : index
    %12 = vector.load %arg4[%c0_7, %c0_8] : memref<16x64xf32, #tpu.memory_space<vmem>>, vector<16x64xf32>
    tpu.vector_store %arg4[%c0_7, %c0_8], %11 {strides = array<i32>} : memref<16x64xf32, #tpu.memory_space<vmem>>, vector<16x64xf32>,
    return
  }
  func.func @transform_0(%arg0: i32) -> (i32, i32) {
    %c0_i32 = arith.constant 0 : i32
    %c0_i32_0 = arith.constant 0 : i32
    return %arg0, %c0_i32 : i32, i32
  }
  func.func @transform_1(%arg0: i32) -> (i32, i32) {
    %c0_i32 = arith.constant 0 : i32
    %c0_i32_0 = arith.constant 0 : i32
    %c0_i32_1 = arith.constant 0 : i32
    return %c0_i32, %c0_i32_0 : i32, i32
  }
  func.func @transform_2(%arg0: i32) -> (i32, i32) {
    %c0_i32 = arith.constant 0 : i32
    %c0_i32_0 = arith.constant 0 : i32
    %c0_i32_1 = arith.constant 0 : i32
    return %c0_i32, %c0_i32_0 : i32, i32
  }
  func.func @transform_3(%arg0: i32) -> (i32, i32) {
    %c0_i32 = arith.constant 0 : i32
    %c0_i32_0 = arith.constant 0 : i32
    return %arg0, %c0_i32 : i32, i32
  }
}

</mosaic_0001>

<llo_original>
// kernel: proj_matmul.1
$region0: #{proj_matmul.1}
  #allocation0 [shape = 'u32[]', space=smem, size = 0x4, offset = 0x4, fixed_abs, tag = 'smem constant byte address 0x4 - core index']
  #allocation1 [shape = 'u32[144,128]{1,0:T(1,128)}', space=vmem, size = 0x12000, scoped, tag = 'internal scratch']
  %s0 = inlined_call_operand.vmem [shape: f32[32,256], index: 0, kind: input, shape index: {}]
  %s1 = inlined_call_operand.vmem [shape: f32[256,64], index: 1, kind: input, shape index: {}]
  %s2 = inlined_call_operand.vmem [shape: f32[2,64], index: 2, kind: input, shape index: {}]
  %s3 = inlined_call_operand.hbm [shape: f32[32,64], index: 3, kind: output, shape index: {}]
  %s4 = sld [smem:[#allocation0]]
  $region45: #{proj_matmul.1} parent=0
    _
  %s6 = ssub.s32 1, %s4
  %s7 = scalar_select 0, %s6, %s4
  $region1: #{proj_matmul.1} parent=0
    #allocation2 [shape = 'u8[16384]{0}', space=vmem, size = 0x4000, scoped, tag = 'output window, operand 0']
    #allocation3 [shape = 's32[2]{0}', space=sflag, size = 0x8, scoped, tag = 'scoped memory for proj_matmul.1']
    %8 = vsyncpa [#allocation3], 0
    %s9 = scalar_lea.sflag [#allocation3], 1
    %10 = vsyncpa %s9, 0
    loop: start=0, step=1, limit=4
    $region2: #{proj_matmul.1} parent=1 // loop_pre_header
      _
    $region3: #{proj_matmul.1} parent=1 // loop_header
      %s12 = sphi 0, %s16
      %p13 = scmp.ge.s32.totalorder %s12, 4
      %s22 = sphi 0, %s24
      %s25 = sphi 0, %s22
      %s26 = sphi 0, %s25
      %s42 = sphi 0, %s26
      %s46 = sphi 0, %s46
      %s48 = sphi 0, %s46
      %s49 = sphi 0, %s48
      %s63 = sphi 0, %s49
      %s67 = sphi 0, %s67
      %s69 = sphi 0, %s67
      %s70 = sphi 0, %s69
      %s84 = sphi 0, %s70
      %s90 = sphi 0, %s92
      %s93 = sphi 0, %s90
      %s94 = sphi 0, %s93
      %s110 = sphi 0, %s94
    $region4: #{proj_matmul.1} parent=1 // loop_header_branch
      %15 = sbr.rel (%p13) target = $region8
    $region5: #{proj_matmul.1} parent=1 // loop_body
      %s17 = ssub.s32 %s12, 1
      %s18 = ssub.s32 %s12, 2
      %s19 = sadd.s32 %s12, 1
      %s20 = ssub.s32 %s12, %s19
      %p21 = scmp.eq.s32.totalorder %s20, 0
      %s23 = sadd.s32 %s22, 1
      %s24 = scalar_select %p21, %s22, %s23
      %p27 = pneg %p21
      %p28 = scmp.eq.s32.totalorder %s12, 1
      %p29 = por %p27, %p28
      %p30 = scmp.ne.s32.totalorder %s22, %s25
      %p31 = scmp.eq.s32.totalorder %s12, 0
      %p32 = por %p30, %p31
      %p33 = scmp.ne.s32.totalorder %s22, %s25
      %p34 = scmp.eq.s32.totalorder %s17, 1
      %p35 = por %p33, %p34
      %p36 = scmp.ne.s32.totalorder %s25, %s26
      %p37 = scmp.eq.s32.totalorder %s17, 0
      %p38 = por %p36, %p37
      %p39 = scmp.ne.s32.totalorder %s25, %s26
      %p40 = scmp.eq.s32.totalorder %s18, 1
      %p41 = por %p39, %p40
      %p43 = scmp.ne.s32.totalorder %s26, %s42
      %p44 = scmp.eq.s32.totalorder %s18, 0
      %p45 = por %p43, %p44
      %s47 = sadd.s32 %s46, 1
      %p50 = scmp.eq.s32.totalorder %s12, 1
      %p51 = scmp.ne.s32.totalorder %s46, %s48
      %p52 = scmp.eq.s32.totalorder %s12, 0
      %p53 = por %p51, %p52
      %p54 = scmp.ne.s32.totalorder %s46, %s48
      %p55 = scmp.eq.s32.totalorder %s17, 1
      %p56 = por %p54, %p55
      %p57 = scmp.ne.s32.totalorder %s48, %s49
      %p58 = scmp.eq.s32.totalorder %s17, 0
      %p59 = por %p57, %p58
      %p60 = scmp.ne.s32.totalorder %s48, %s49
      %p61 = scmp.eq.s32.totalorder %s18, 1
      %p62 = por %p60, %p61
      %p64 = scmp.ne.s32.totalorder %s49, %s63
      %p65 = scmp.eq.s32.totalorder %s18, 0
      %p66 = por %p64, %p65
      %s68 = sadd.s32 %s67, 1
      %p71 = scmp.eq.s32.totalorder %s12, 1
      %p72 = scmp.ne.s32.totalorder %s67, %s69
      %p73 = scmp.eq.s32.totalorder %s12, 0
      %p74 = por %p72, %p73
      %p75 = scmp.ne.s32.totalorder %s67, %s69
      %p76 = scmp.eq.s32.totalorder %s17, 1
      %p77 = por %p75, %p76
      %p78 = scmp.ne.s32.totalorder %s69, %s70
      %p79 = scmp.eq.s32.totalorder %s17, 0
      %p80 = por %p78, %p79
      %p81 = scmp.ne.s32.totalorder %s69, %s70
      %p82 = scmp.eq.s32.totalorder %s18, 1
      %p83 = por %p81, %p82
      %p85 = scmp.ne.s32.totalorder %s70, %s84
      %p86 = scmp.eq.s32.totalorder %s18, 0
      %p87 = por %p85, %p86
      %s88 = ssub.s32 %s12, %s19
      %p89 = scmp.eq.s32.totalorder %s88, 0
      %s91 = sadd.s32 %s90, 1
      %s92 = scalar_select %p89, %s90, %s91
      %p95 = pneg %p89
      %p96 = scmp.eq.s32.totalorder %s12, 1
      %p97 = por %p95, %p96
      %p98 = scmp.ne.s32.totalorder %s90, %s93
      %p99 = scmp.eq.s32.totalorder %s12, 0
      %p100 = por %p98, %p99
      %p101 = scmp.ne.s32.totalorder %s90, %s93
      %p102 = scmp.eq.s32.totalorder %s17, 1
      %p103 = por %p101, %p102
      %p104 = scmp.ne.s32.totalorder %s93, %s94
      %p105 = scmp.eq.s32.totalorder %s17, 0
      %p106 = por %p104, %p105
      %p107 = scmp.ne.s32.totalorder %s93, %s94
      %p108 = scmp.eq.s32.totalorder %s18, 1
      %p109 = por %p107, %p108
      %p111 = scmp.ne.s32.totalorder %s94, %s110
      %p112 = scmp.eq.s32.totalorder %s18, 0
      %p113 = por %p111, %p112
      %p114 = scmp.le.s32.totalorder 1, %s12
      %p115 = scmp.lt.s32.totalorder %s12, 3
      %p116 = pnand %p114, %p115
      %p117 = pneg %p116
      // Predicated region
      $region9: #{proj_matmul.1} parent=5 // pred_check
        _
      $region10: #{proj_matmul.1} parent=5 // pred_check_branch
        %119 = sbr.rel (%p116) target = $region12
      $region11: #{proj_matmul.1} parent=5 // pred_region
        %s120 = ssub.s32 %s12, 1
        // Predicated region
        $region13: #{proj_matmul.1} parent=11 // pred_check
          %p121 = pneg %p59
        $region14: #{proj_matmul.1} parent=11 // pred_check_branch
          %123 = sbr.rel (%p121) target = $region16
        $region15: #{proj_matmul.1} parent=11 // pred_region
          _
        $region16: #{proj_matmul.1} parent=11 // pred_fallthru
          _
        // Predicated region
        $region17: #{proj_matmul.1} parent=11 // pred_check
          %p124 = pneg %p80
        $region18: #{proj_matmul.1} parent=11 // pred_check_branch
          %126 = sbr.rel (%p124) target = $region20
        $region19: #{proj_matmul.1} parent=11 // pred_region
          _
        $region20: #{proj_matmul.1} parent=11 // pred_fallthru
          _
      $region12: #{proj_matmul.1} parent=5 // pred_fallthru
        _
      %p127 = scmp.lt.s32.totalorder %s12, 2
      // Predicated region
      $region21: #{proj_matmul.1} parent=5 // pred_check
        %p128 = pneg %p127
      $region22: #{proj_matmul.1} parent=5 // pred_check_branch
        %130 = sbr.rel (%p128) target = $region24
      $region23: #{proj_matmul.1} parent=5 // pred_region
        // Predicated region
        $region25: #{proj_matmul.1} parent=23 // pred_check
          %p131 = pneg %p32
        $region26: #{proj_matmul.1} parent=23 // pred_check_branch
          %133 = sbr.rel (%p131) target = $region28
        $region27: #{proj_matmul.1} parent=23 // pred_region
          %s134 = smul.u32 2, %s12
          %p135 = scmp.lt.s32.totalorder %s134, 3
          %s136 = scalar_select %p135, %s134, 3
          %s137 = smul.addr %s136, 2
          %s138 = smul.addr %s137, 8
          %s139 = scalar_lea.vmem %s0, %s138
          %s140 = smul.u32 2, %s12
        $region28: #{proj_matmul.1} parent=23 // pred_fallthru
          _
      $region24: #{proj_matmul.1} parent=5 // pred_fallthru
        _
      %p141 = scmp.le.s32.totalorder 1, %s12
      %p142 = scmp.lt.s32.totalorder %s12, 3
      %p143 = pnand %p141, %p142
      %p144 = pneg %p143
      // Predicated region
      $region29: #{proj_matmul.1} parent=5 // pred_check
        _
      $region30: #{proj_matmul.1} parent=5 // pred_check_branch
        %146 = sbr.rel (%p143) target = $region32
      $region31: #{proj_matmul.1} parent=5 // pred_region
        %s147 = ssub.s32 %s12, 1
        %s148 = smul.u32 2, %s17
        %p149 = scmp.lt.s32.totalorder %s148, 3
        %s150 = scalar_select %p149, %s148, 3
        %s151 = smul.addr %s150, 2
        %s152 = smul.addr %s151, 8
        %s153 = scalar_lea.vmem %s0, %s152
        %p154 = pneg %p38
        %p155 = pneg %p35
        %p156 = pneg %p59
        %p157 = pneg %p56
        %p158 = pneg %p80
        %p159 = pneg %p77
        %p160 = pneg %p106
        %p161 = pneg %p103
        %s162 = sand.u32 %s93, 1
        %s163 = scalar_lea.sflag [#allocation3], %s162
        %s164 = sand.u32 %s93, 1
        %s165 = smul.addr %s164, 16
        %s166 = scalar_lea.vmem [#allocation2], %s165
        %s167 = smul.u32 2, %s17
        %p168 = scmp.lt.s32.totalorder %s167, 3
        %s169 = scalar_select %p168, %s167, 3
        %s170 = smul.addr %s169, 2
        %s171 = smul.addr %s170, 8
        %s172 = scalar_lea.vmem %s0, %s171
        %s173 = smul.u32 2, %s17
        %s174 = smul.u32 2, %s17
        %v175 = vld [vmem:[%s172] sm:$0xff]
        %v176 = vld [vmem:[%s172 + $0x8] sm:$0xff]
        %v177 = vld [vmem:[%s172 + $0x10] sm:$0xff]
        %v178 = vld [vmem:[%s172 + $0x18] sm:$0xff]
        %v179 = vld [vmem:[%s1] sm:$0xff]
        %v180 = vld [vmem:[%s1 + $0x8] sm:$0xff]
        %v181 = vld [vmem:[%s1 + $0x10] sm:$0xff]
        %v182 = vld [vmem:[%s1 + $0x18] sm:$0xff]
        %v183 = vld [vmem:[%s1 + $0x20] sm:$0xff]
        %v184 = vld [vmem:[%s1 + $0x28] sm:$0xff]
        %v185 = vld [vmem:[%s1 + $0x30] sm:$0xff]
        %v186 = vld [vmem:[%s1 + $0x38] sm:$0xff]
        %v187 = vld [vmem:[%s1 + $0x40] sm:$0xff]
        %v188 = vld [vmem:[%s1 + $0x48] sm:$0xff]
        %v189 = vld [vmem:[%s1 + $0x50] sm:$0xff]
        %v190 = vld [vmem:[%s1 + $0x58] sm:$0xff]
        %v191 = vld [vmem:[%s1 + $0x60] sm:$0xff]
        %v192 = vld [vmem:[%s1 + $0x68] sm:$0xff]
        %v193 = vld [vmem:[%s1 + $0x70] sm:$0xff]
        %v194 = vld [vmem:[%s1 + $0x78] sm:$0xff]
        %v195 = vld [vmem:[%s1 + $0x80] sm:$0xff]
        %v196 = vld [vmem:[%s1 + $0x88] sm:$0xff]
        %v197 = vld [vmem:[%s1 + $0x90] sm:$0xff]
        %v198 = vld [vmem:[%s1 + $0x98] sm:$0xff]
        %v199 = vld [vmem:[%s1 + $0xa0] sm:$0xff]
        %v200 = vld [vmem:[%s1 + $0xa8] sm:$0xff]
        %v201 = vld [vmem:[%s1 + $0xb0] sm:$0xff]
        %v202 = vld [vmem:[%s1 + $0xb8] sm:$0xff]
        %v203 = vld [vmem:[%s1 + $0xc0] sm:$0xff]
        %v204 = vld [vmem:[%s1 + $0xc8] sm:$0xff]
        %v205 = vld [vmem:[%s1 + $0xd0] sm:$0xff]
        %v206 = vld [vmem:[%s1 + $0xd8] sm:$0xff]
        %v207 = vld [vmem:[%s1 + $0xe0] sm:$0xff]
        %v208 = vld [vmem:[%s1 + $0xe8] sm:$0xff]
        %v209 = vld [vmem:[%s1 + $0xf0] sm:$0xff]
        %v210 = vld [vmem:[%s1 + $0xf8] sm:$0xff]
        %v211 = vld [vmem:[%s2] sm:$0x1]
        %v212 = vlaneseq
        %v213 = vshrl.u32 %v212, 7
        %v214 = vsub.s32 0, %v213
        %v215 = vrot.slane %v211, %v214
        %216 = vmatprep.subr.mxu0 0.0
        %217 = vmatpush1.msra.mxu0 %v194
        %218 = vmatprep.subr.mxu0 0.0
        %219 = vmatpush1.msra.mxu0 %v193
        %220 = vmatprep.subr.mxu0 0.0
        %221 = vmatpush1.msra.mxu0 %v192
        %222 = vmatprep.subr.mxu0 0.0
        %223 = vmatpush1.msra.mxu0 %v191
        %224 = vmatprep.subr.mxu0 0.0
        %225 = vmatpush1.msra.mxu0 %v190
        %226 = vmatprep.subr.mxu0 0.0
        %227 = vmatpush1.msra.mxu0 %v189
        %228 = vmatprep.subr.mxu0 0.0
        %229 = vmatpush1.msra.mxu0 %v188
        %230 = vmatprep.subr.mxu0 0.0
        %231 = vmatpush1.msra.mxu0 %v187
        %232 = vmatprep.subr.mxu0 0.0
        %233 = vmatpush1.msra.mxu0 %v186
        %234 = vmatprep.subr.mxu0 0.0
        %235 = vmatpush1.msra.mxu0 %v185
        %236 = vmatprep.subr.mxu0 0.0
        %237 = vmatpush1.msra.mxu0 %v184
        %238 = vmatprep.subr.mxu0 0.0
        %239 = vmatpush1.msra.mxu0 %v183
        %240 = vmatprep.subr.mxu0 0.0
        %241 = vmatpush1.msra.mxu0 %v182
        %242 = vmatprep.subr.mxu0 0.0
        %243 = vmatpush1.msra.mxu0 %v181
        %244 = vmatprep.subr.mxu0 0.0
        %245 = vmatpush1.msra.mxu0 %v180
        %246 = vmatprep.subr.mxu0 0.0
        %247 = vmatpush1.msra.mxu0 %v179
        %248 = vmatprep.subr.mxu0 0.0
        %249 = vmatpush2.msra.mxu0 %v210
        %250 = vmatprep.subr.mxu0 0.0
        %251 = vmatpush2.msra.mxu0 %v209
        %252 = vmatprep.subr.mxu0 0.0
        %253 = vmatpush2.msra.mxu0 %v208
        %254 = vmatprep.subr.mxu0 0.0
        %255 = vmatpush2.msra.mxu0 %v207
        %256 = vmatprep.subr.mxu0 0.0
        %257 = vmatpush2.msra.mxu0 %v206
        %258 = vmatprep.subr.mxu0 0.0
        %259 = vmatpush2.msra.mxu0 %v205
        %260 = vmatprep.subr.mxu0 0.0
        %261 = vmatpush2.msra.mxu0 %v204
        %262 = vmatprep.subr.mxu0 0.0
        %263 = vmatpush2.msra.mxu0 %v203
        %264 = vmatprep.subr.mxu0 0.0
        %265 = vmatpush2.msra.mxu0 %v202
        %266 = vmatprep.subr.mxu0 0.0
        %267 = vmatpush2.msra.mxu0 %v201
        %268 = vmatprep.subr.mxu0 0.0
        %269 = vmatpush2.msra.mxu0 %v200
        %270 = vmatprep.subr.mxu0 0.0
        %271 = vmatpush2.msra.mxu0 %v199
        %272 = vmatprep.subr.mxu0 0.0
        %273 = vmatpush2.msra.mxu0 %v198
        %274 = vmatprep.subr.mxu0 0.0
        %275 = vmatpush2.msra.mxu0 %v197
        %276 = vmatprep.subr.mxu0 0.0
        %277 = vmatpush2.msra.mxu0 %v196
        %278 = vmatprep.subr.mxu0 0.0
        %279 = vmatpush2.msra.mxu0 %v195
        %280 = vmatprep.mubr.f32.mxu0 %v176
        %281 = vmatmul.mubr.f32.gmra.mxu0 %v175
        %v282 = vpop.f32.mrf.mxu0
        %v283 = vadd.f32 %v215, %v282
        %v284 = vpop.f32.mrf.mxu0
        %285 = vmatprep.mubr.f32.mxu0 %v178
        %286 = vmatmul.mubr.f32.gmra.mxu0 %v177
        %v287 = vpop.f32.mrf.mxu0
        %v288 = vadd.f32 %v215, %v287
        %v289 = vpop.f32.mrf.mxu0
        %290 = vdwg.mxu0
        %vm291 = vcmp.ge.f32.partialorder %v283, 0.0
        %vm292 = vcmp.ge.f32.partialorder %v288, 0.0
        %v293 = vld [vmem:[%s2 + $0x1] sm:$0x1]
        %v294 = vlaneseq
        %v295 = vshrl.u32 %v294, 7
        %v296 = vsub.s32 0, %v295
        %v297 = vrot.slane %v293, %v296
        %v298 = vmul.f32 %v297, %v283
        %v299 = vmul.f32 %v297, %v288
        %v300 = vsel %vm291, %v283, %v298
        %v301 = vsel %vm292, %v288, %v299
        %vm302 = vcmask 523264
        %303 = vst.msk [vmem:[%s166] sm:$0xff] %vm302, %v300
        %304 = vst.msk [vmem:[%s166 + $0x8] sm:$0xff] %vm302, %v301
        %s305 = sand.u32 %s93, 1
        %s306 = scalar_lea.sflag [#allocation3], %s305
        %s307 = sand.u32 %s93, 1
        %s308 = smul.addr %s307, 16
        %s309 = scalar_lea.vmem [#allocation2], %s308
        // Predicated region
        $region33: #{proj_matmul.1} parent=31 // pred_check
          %p310 = pneg %p103
        $region34: #{proj_matmul.1} parent=31 // pred_check_branch
          %312 = sbr.rel (%p310) target = $region36
        $region35: #{proj_matmul.1} parent=31 // pred_region
          %s313 = smul.u32 2, %s17
          %s315 = ssub.s32 256, 256
          %316 = vsyncadd %s306, %s315
          %s317 = smul.addr %s313, 128
          %s318 = scalar_lea.hbm %s3, %s317
          %s319 = sshll.u32 %s309, 4
          %s320 = int_to_ptr.vmem [resolvable:$true] %s319
          %325 = dma.vmem_to_hbm [thread:$0]  %s320, 256, %s318, %s306, 128, 128, 8
        $region36: #{proj_matmul.1} parent=31 // pred_fallthru
          _
      $region32: #{proj_matmul.1} parent=5 // pred_fallthru
        _
      %p326 = scmp.le.s32.totalorder 2, %s12
      // Predicated region
      $region37: #{proj_matmul.1} parent=5 // pred_check
        %p327 = pneg %p326
      $region38: #{proj_matmul.1} parent=5 // pred_check_branch
        %329 = sbr.rel (%p327) target = $region40
      $region39: #{proj_matmul.1} parent=5 // pred_region
        %s330 = ssub.s32 %s12, 2
        // Predicated region
        $region41: #{proj_matmul.1} parent=39 // pred_check
          %p331 = pneg %p109
        $region42: #{proj_matmul.1} parent=39 // pred_check_branch
          %333 = sbr.rel (%p331) target = $region44
        $region43: #{proj_matmul.1} parent=39 // pred_region
          %s334 = sand.u32 %s94, 1
          %s335 = scalar_lea.sflag [#allocation3], %s334
          %s336 = sand.u32 %s94, 1
          %s337 = smul.addr %s336, 16
          %s338 = scalar_lea.vmem [#allocation2], %s337
          %339 = dma.done %s335, 256
        $region44: #{proj_matmul.1} parent=39 // pred_fallthru
          _
      $region40: #{proj_matmul.1} parent=5 // pred_fallthru
        _
    $region6: #{proj_matmul.1} parent=1 // loop_footer
      %s16 = sadd.s32 1, %s12
    $region7: #{proj_matmul.1} parent=1 // loop_footer_branch
      %11 = sbr.rel target = $region3
    $region8: #{proj_matmul.1} parent=1 // loop_exit
      _
    %340 = vsyncpa [#allocation3], 1
    %s341 = scalar_lea.sflag [#allocation3], 1
    %342 = vsyncpa %s341, 1

</llo_original>
